<compile_context>
chip_gen: v6e
topology: v6e:2x2x1
jax: 0.10.0
libtpu: 0.0.40
codegen_flags: <defaults>
</compile_context>

<pallas_src>
import jax
import jax.numpy as jnp
import numpy as np
from jax.experimental import pallas as pl
from jax.experimental.pallas import tpu as pltpu


# ---------------------------- Pallas kernel ----------------------------

def _outconv_kernel(w_ref, b_ref, x_ref, o_ref):
    """Fused 1x1 conv + bias; batch folded onto the sublane axis; VPU-only.

    w_ref: SMEM (Cout, Cin) f32  -- weights read as scalars (tiny K -> skip MXU)
    b_ref: SMEM (Cout,)     f32  -- bias read as scalars
    x_ref: VMEM (N*Cin,  T)      -- batch*channel rows, lane tile T of H*W
    o_ref: VMEM (N*Cout, T)
    """
    cout, cin = w_ref.shape
    n = o_ref.shape[0] // cout
    T = o_ref.shape[1]
    # Fully unrolled at trace time: N*Cout*Cin scalar multiply-adds on (1, T) rows.
    for nb in range(n):
        for o in range(cout):
            acc = jnp.full((1, T), b_ref[o], dtype=jnp.float32)
            for c in range(cin):
                row = x_ref[pl.ds(nb * cin + c, 1), :].astype(jnp.float32)
                acc = acc + w_ref[o, c] * row
            o_ref[pl.ds(nb * cout + o, 1), :] = acc.astype(o_ref.dtype)


# ------------------------------ wrapper ------------------------------

def outconv_pallas(x_nchw, weight_oi, bias, *, max_lanes=4096):
    """x_nchw: (N, Cin, H, W); weight_oi: (Cout, Cin); bias: (Cout,)."""
    N, Cin, H, W = x_nchw.shape
    Cout = weight_oi.shape[0]
    HW = H * W
    out_dtype = x_nchw.dtype

    x2d = x_nchw.reshape(N * Cin, HW)            # free view of NCHW, no transpose
    w = weight_oi.astype(jnp.float32)            # scalar tables -> SMEM (32-bit)
    b = bias.astype(jnp.float32)

    # Lane (H*W) tiling: multiples of 128 so large spatial sizes fit VMEM on every
    # generation (v7x: 64 MiB physical).  At HW=256 this is a single tile.
    if HW % 128 == 0:
        lane_tile = min(HW, max_lanes)
        while HW % lane_tile:
            lane_tile -= 128
    else:
        lane_tile = HW                           # full-dim block is always legal
    num_tiles = HW // lane_tile

    flops = 2 * N * Cout * Cin * HW
    bytes_accessed = (x2d.size * x2d.dtype.itemsize
                      + w.size * 4 + b.size * 4
                      + N * Cout * HW * jnp.dtype(out_dtype).itemsize)

    out2d = pl.pallas_call(
        _outconv_kernel,
        out_shape=jax.ShapeDtypeStruct((N * Cout, HW), out_dtype),
        grid=(num_tiles,),
        in_specs=[
            pl.BlockSpec(memory_space=pltpu.MemorySpace.SMEM),        # weight scalars
            pl.BlockSpec(memory_space=pltpu.MemorySpace.SMEM),        # bias scalars
            pl.BlockSpec((N * Cin, lane_tile), lambda t: (0, t)),     # input lane tile
        ],
        out_specs=pl.BlockSpec((N * Cout, lane_tile), lambda t: (0, t)),
        compiler_params=pltpu.CompilerParams(
            dimension_semantics=("arbitrary",)),
        cost_estimate=pl.CostEstimate(flops=flops, transcendentals=0,
                                      bytes_accessed=bytes_accessed),
    )(w, b, x2d)

    return out2d.reshape(N, Cout, H, W)


# --------------------------- pure-JAX reference ---------------------------

def outconv_ref(x_nchw, weight_oi, bias):
    w = weight_oi.reshape(weight_oi.shape[0], weight_oi.shape[1], 1, 1)
    y = jax.lax.conv_general_dilated(
        x_nchw.astype(jnp.float32), w.astype(jnp.float32),
        window_strides=(1, 1), padding="VALID",
        dimension_numbers=("NCHW", "OIHW", "NCHW"))
    return y + bias.reshape(1, -1, 1, 1).astype(jnp.float32)


# ------------------------------- main -------------------------------

if __name__ == "__main__":
    key = jax.random.PRNGKey(0)
    kx, kw, kb = jax.random.split(key, 3)

    N, in_ch, H, W = 2, 4, 16, 16
    out_ch = 4

    x = jax.random.normal(kx, (N, in_ch, H, W), jnp.float32)
    # PyTorch Conv2d(in_ch, out_ch, 1) weight is (out_ch, in_ch, 1, 1); store squeezed.
    weight = jax.random.normal(kw, (out_ch, in_ch), jnp.float32) * 0.3
    bias = jax.random.normal(kb, (out_ch,), jnp.float32) * 0.1

    out = jax.block_until_ready(outconv_pallas(x, weight, bias))
    ref = jax.block_until_ready(outconv_ref(x, weight, bias))

    assert out.shape == (N, out_ch, H, W), out.shape
    np.testing.assert_allclose(np.asarray(out), np.asarray(ref),
                               atol=1e-5, rtol=1e-5)
    print("KERNEL_OK")
</pallas_src>

<mosaic_0001>
module attributes {stable_mosaic.version = 11 : i64} {
  func.func @_outconv_kernel(%arg0: i32, %arg1: memref<4x4xf32, #tpu.memory_space<smem>>, %arg2: memref<4xf32, #tpu.memory_space<smem>>, %arg3: memref<8x256xf32, #tpu.memory_space<vmem>>, %arg4: memref<8x256xf32, #tpu.memory_space<vmem>>) attributes {dimension_semantics = [#tpu.dimension_semantics<arbitrary>], iteration_bounds = array<i64: 1>, scalar_prefetch = 0 : i64, scratch_operands = 0 : i64, tpu.core_type = #tpu.core_type<tc>, window_params = [{transform_indices = @transform_0, window_bounds = array<i64: 4, 4>}, {transform_indices = @transform_1, window_bounds = array<i64: 4>}, {transform_indices = @transform_2, window_bounds = array<i64: 8, 256>}, {transform_indices = @transform_3, window_bounds = array<i64: 8, 256>}]} {
    %c0 = arith.constant 0 : index
    %0 = memref.load %arg2[%c0] : memref<4xf32, #tpu.memory_space<smem>>
    %1 = vector.broadcast %0 : f32 to vector<1x256xf32>
    %c0_0 = arith.constant 0 : index
    %c0_1 = arith.constant 0 : index
    %2 = vector.load %arg3[%c0_0, %c0_1] : memref<8x256xf32, #tpu.memory_space<vmem>>, vector<1x256xf32>
    %c0_2 = arith.constant 0 : index
    %c0_3 = arith.constant 0 : index
    %3 = memref.load %arg1[%c0_2, %c0_3] : memref<4x4xf32, #tpu.memory_space<smem>>
    %4 = vector.broadcast %3 : f32 to vector<1x256xf32>
    %5 = arith.mulf %4, %2 : vector<1x256xf32>
    %6 = arith.addf %1, %5 : vector<1x256xf32>
    %c1 = arith.constant 1 : index
    %c0_4 = arith.constant 0 : index
    %7 = vector.load %arg3[%c1, %c0_4] : memref<8x256xf32, #tpu.memory_space<vmem>>, vector<1x256xf32>
    %c0_5 = arith.constant 0 : index
    %c1_6 = arith.constant 1 : index
    %8 = memref.load %arg1[%c0_5, %c1_6] : memref<4x4xf32, #tpu.memory_space<smem>>
    %9 = vector.broadcast %8 : f32 to vector<1x256xf32>
    %10 = arith.mulf %9, %7 : vector<1x256xf32>
    %11 = arith.addf %6, %10 : vector<1x256xf32>
    %c2 = arith.constant 2 : index
    %c0_7 = arith.constant 0 : index
    %12 = vector.load %arg3[%c2, %c0_7] : memref<8x256xf32, #tpu.memory_space<vmem>>, vector<1x256xf32>
    %c0_8 = arith.constant 0 : index
    %c2_9 = arith.constant 2 : index
    %13 = memref.load %arg1[%c0_8, %c2_9] : memref<4x4xf32, #tpu.memory_space<smem>>
    %14 = vector.broadcast %13 : f32 to vector<1x256xf32>
    %15 = arith.mulf %14, %12 : vector<1x256xf32>
    %16 = arith.addf %11, %15 : vector<1x256xf32>
    %c3 = arith.constant 3 : index
    %c0_10 = arith.constant 0 : index
    %17 = vector.load %arg3[%c3, %c0_10] : memref<8x256xf32, #tpu.memory_space<vmem>>, vector<1x256xf32>
    %c0_11 = arith.constant 0 : index
    %c3_12 = arith.constant 3 : index
    %18 = memref.load %arg1[%c0_11, %c3_12] : memref<4x4xf32, #tpu.memory_space<smem>>
    %19 = vector.broadcast %18 : f32 to vector<1x256xf32>
    %20 = arith.mulf %19, %17 : vector<1x256xf32>
    %21 = arith.addf %16, %20 : vector<1x256xf32>
    %c0_13 = arith.constant 0 : index
    %c0_14 = arith.constant 0 : index
    %22 = vector.load %arg4[%c0_13, %c0_14] : memref<8x256xf32, #tpu.memory_space<vmem>>, vector<1x256xf32>
    tpu.vector_store %arg4[%c0_13, %c0_14], %21 {strides = array<i32>} : memref<8x256xf32, #tpu.memory_space<vmem>>, vector<1x256xf32>,
    %c1_15 = arith.constant 1 : index
    %23 = memref.load %arg2[%c1_15] : memref<4xf32, #tpu.memory_space<smem>>
    %24 = vector.broadcast %23 : f32 to vector<1x256xf32>
    %c0_16 = arith.constant 0 : index
    %c0_17 = arith.constant 0 : index
    %25 = vector.load %arg3[%c0_16, %c0_17] : memref<8x256xf32, #tpu.memory_space<vmem>>, vector<1x256xf32>
    %c1_18 = arith.constant 1 : index
    %c0_19 = arith.constant 0 : index
    %26 = memref.load %arg1[%c1_18, %c0_19] : memref<4x4xf32, #tpu.memory_space<smem>>
    %27 = vector.broadcast %26 : f32 to vector<1x256xf32>
    %28 = arith.mulf %27, %25 : vector<1x256xf32>
    %29 = arith.addf %24, %28 : vector<1x256xf32>
    %c1_20 = arith.constant 1 : index
    %c0_21 = arith.constant 0 : index
    %30 = vector.load %arg3[%c1_20, %c0_21] : memref<8x256xf32, #tpu.memory_space<vmem>>, vector<1x256xf32>
    %c1_22 = arith.constant 1 : index
    %c1_23 = arith.constant 1 : index
    %31 = memref.load %arg1[%c1_22, %c1_23] : memref<4x4xf32, #tpu.memory_space<smem>>
    %32 = vector.broadcast %31 : f32 to vector<1x256xf32>
    %33 = arith.mulf %32, %30 : vector<1x256xf32>
    %34 = arith.addf %29, %33 : vector<1x256xf32>
    %c2_24 = arith.constant 2 : index
    %c0_25 = arith.constant 0 : index
    %35 = vector.load %arg3[%c2_24, %c0_25] : memref<8x256xf32, #tpu.memory_space<vmem>>, vector<1x256xf32>
    %c1_26 = arith.constant 1 : index
    %c2_27 = arith.constant 2 : index
    %36 = memref.load %arg1[%c1_26, %c2_27] : memref<4x4xf32, #tpu.memory_space<smem>>
    %37 = vector.broadcast %36 : f32 to vector<1x256xf32>
    %38 = arith.mulf %37, %35 : vector<1x256xf32>
    %39 = arith.addf %34, %38 : vector<1x256xf32>
    %c3_28 = arith.constant 3 : index
    %c0_29 = arith.constant 0 : index
    %40 = vector.load %arg3[%c3_28, %c0_29] : memref<8x256xf32, #tpu.memory_space<vmem>>, vector<1x256xf32>
    %c1_30 = arith.constant 1 : index
    %c3_31 = arith.constant 3 : index
    %41 = memref.load %arg1[%c1_30, %c3_31] : memref<4x4xf32, #tpu.memory_space<smem>>
    %42 = vector.broadcast %41 : f32 to vector<1x256xf32>
    %43 = arith.mulf %42, %40 : vector<1x256xf32>
    %44 = arith.addf %39, %43 : vector<1x256xf32>
    %c1_32 = arith.constant 1 : index
    %c0_33 = arith.constant 0 : index
    %45 = vector.load %arg4[%c1_32, %c0_33] : memref<8x256xf32, #tpu.memory_space<vmem>>, vector<1x256xf32>
    tpu.vector_store %arg4[%c1_32, %c0_33], %44 {strides = array<i32>} : memref<8x256xf32, #tpu.memory_space<vmem>>, vector<1x256xf32>,
    %c2_34 = arith.constant 2 : index
    %46 = memref.load %arg2[%c2_34] : memref<4xf32, #tpu.memory_space<smem>>
    %47 = vector.broadcast %46 : f32 to vector<1x256xf32>
    %c0_35 = arith.constant 0 : index
    %c0_36 = arith.constant 0 : index
    %48 = vector.load %arg3[%c0_35, %c0_36] : memref<8x256xf32, #tpu.memory_space<vmem>>, vector<1x256xf32>
    %c2_37 = arith.constant 2 : index
    %c0_38 = arith.constant 0 : index
    %49 = memref.load %arg1[%c2_37, %c0_38] : memref<4x4xf32, #tpu.memory_space<smem>>
    %50 = vector.broadcast %49 : f32 to vector<1x256xf32>
    %51 = arith.mulf %50, %48 : vector<1x256xf32>
    %52 = arith.addf %47, %51 : vector<1x256xf32>
    %c1_39 = arith.constant 1 : index
    %c0_40 = arith.constant 0 : index
    %53 = vector.load %arg3[%c1_39, %c0_40] : memref<8x256xf32, #tpu.memory_space<vmem>>, vector<1x256xf32>
    %c2_41 = arith.constant 2 : index
    %c1_42 = arith.constant 1 : index
    %54 = memref.load %arg1[%c2_41, %c1_42] : memref<4x4xf32, #tpu.memory_space<smem>>
    %55 = vector.broadcast %54 : f32 to vector<1x256xf32>
    %56 = arith.mulf %55, %53 : vector<1x256xf32>
    %57 = arith.addf %52, %56 : vector<1x256xf32>
    %c2_43 = arith.constant 2 : index
    %c0_44 = arith.constant 0 : index
    %58 = vector.load %arg3[%c2_43, %c0_44] : memref<8x256xf32, #tpu.memory_space<vmem>>, vector<1x256xf32>
    %c2_45 = arith.constant 2 : index
    %c2_46 = arith.constant 2 : index
    %59 = memref.load %arg1[%c2_45, %c2_46] : memref<4x4xf32, #tpu.memory_space<smem>>
    %60 = vector.broadcast %59 : f32 to vector<1x256xf32>
    %61 = arith.mulf %60, %58 : vector<1x256xf32>
    %62 = arith.addf %57, %61 : vector<1x256xf32>
    %c3_47 = arith.constant 3 : index
    %c0_48 = arith.constant 0 : index
    %63 = vector.load %arg3[%c3_47, %c0_48] : memref<8x256xf32, #tpu.memory_space<vmem>>, vector<1x256xf32>
    %c2_49 = arith.constant 2 : index
    %c3_50 = arith.constant 3 : index
    %64 = memref.load %arg1[%c2_49, %c3_50] : memref<4x4xf32, #tpu.memory_space<smem>>
    %65 = vector.broadcast %64 : f32 to vector<1x256xf32>
    %66 = arith.mulf %65, %63 : vector<1x256xf32>
    %67 = arith.addf %62, %66 : vector<1x256xf32>
    %c2_51 = arith.constant 2 : index
    %c0_52 = arith.constant 0 : index
    %68 = vector.load %arg4[%c2_51, %c0_52] : memref<8x256xf32, #tpu.memory_space<vmem>>, vector<1x256xf32>
    tpu.vector_store %arg4[%c2_51, %c0_52], %67 {strides = array<i32>} : memref<8x256xf32, #tpu.memory_space<vmem>>, vector<1x256xf32>,
    %c3_53 = arith.constant 3 : index
    %69 = memref.load %arg2[%c3_53] : memref<4xf32, #tpu.memory_space<smem>>
    %70 = vector.broadcast %69 : f32 to vector<1x256xf32>
    %c0_54 = arith.constant 0 : index
    %c0_55 = arith.constant 0 : index
    %71 = vector.load %arg3[%c0_54, %c0_55] : memref<8x256xf32, #tpu.memory_space<vmem>>, vector<1x256xf32>
    %c3_56 = arith.constant 3 : index
    %c0_57 = arith.constant 0 : index
    %72 = memref.load %arg1[%c3_56, %c0_57] : memref<4x4xf32, #tpu.memory_space<smem>>
    %73 = vector.broadcast %72 : f32 to vector<1x256xf32>
    %74 = arith.mulf %73, %71 : vector<1x256xf32>
    %75 = arith.addf %70, %74 : vector<1x256xf32>
    %c1_58 = arith.constant 1 : index
    %c0_59 = arith.constant 0 : index
    %76 = vector.load %arg3[%c1_58, %c0_59] : memref<8x256xf32, #tpu.memory_space<vmem>>, vector<1x256xf32>
    %c3_60 = arith.constant 3 : index
    %c1_61 = arith.constant 1 : index
    %77 = memref.load %arg1[%c3_60, %c1_61] : memref<4x4xf32, #tpu.memory_space<smem>>
    %78 = vector.broadcast %77 : f32 to vector<1x256xf32>
    %79 = arith.mulf %78, %76 : vector<1x256xf32>
    %80 = arith.addf %75, %79 : vector<1x256xf32>
    %c2_62 = arith.constant 2 : index
    %c0_63 = arith.constant 0 : index
    %81 = vector.load %arg3[%c2_62, %c0_63] : memref<8x256xf32, #tpu.memory_space<vmem>>, vector<1x256xf32>
    %c3_64 = arith.constant 3 : index
    %c2_65 = arith.constant 2 : index
    %82 = memref.load %arg1[%c3_64, %c2_65] : memref<4x4xf32, #tpu.memory_space<smem>>
    %83 = vector.broadcast %82 : f32 to vector<1x256xf32>
    %84 = arith.mulf %83, %81 : vector<1x256xf32>
    %85 = arith.addf %80, %84 : vector<1x256xf32>
    %c3_66 = arith.constant 3 : index
    %c0_67 = arith.constant 0 : index
    %86 = vector.load %arg3[%c3_66, %c0_67] : memref<8x256xf32, #tpu.memory_space<vmem>>, vector<1x256xf32>
    %c3_68 = arith.constant 3 : index
    %c3_69 = arith.constant 3 : index
    %87 = memref.load %arg1[%c3_68, %c3_69] : memref<4x4xf32, #tpu.memory_space<smem>>
    %88 = vector.broadcast %87 : f32 to vector<1x256xf32>
    %89 = arith.mulf %88, %86 : vector<1x256xf32>
    %90 = arith.addf %85, %89 : vector<1x256xf32>
    %c3_70 = arith.constant 3 : index
    %c0_71 = arith.constant 0 : index
    %91 = vector.load %arg4[%c3_70, %c0_71] : memref<8x256xf32, #tpu.memory_space<vmem>>, vector<1x256xf32>
    tpu.vector_store %arg4[%c3_70, %c0_71], %90 {strides = array<i32>} : memref<8x256xf32, #tpu.memory_space<vmem>>, vector<1x256xf32>,
    %c0_72 = arith.constant 0 : index
    %92 = memref.load %arg2[%c0_72] : memref<4xf32, #tpu.memory_space<smem>>
    %93 = vector.broadcast %92 : f32 to vector<1x256xf32>
    %c4 = arith.constant 4 : index
    %c0_73 = arith.constant 0 : index
    %94 = vector.load %arg3[%c4, %c0_73] : memref<8x256xf32, #tpu.memory_space<vmem>>, vector<1x256xf32>
    %c0_74 = arith.constant 0 : index
    %c0_75 = arith.constant 0 : index
    %95 = memref.load %arg1[%c0_74, %c0_75] : memref<4x4xf32, #tpu.memory_space<smem>>
    %96 = vector.broadcast %95 : f32 to vector<1x256xf32>
    %97 = arith.mulf %96, %94 : vector<1x256xf32>
    %98 = arith.addf %93, %97 : vector<1x256xf32>
    %c5 = arith.constant 5 : index
    %c0_76 = arith.constant 0 : index
    %99 = vector.load %arg3[%c5, %c0_76] : memref<8x256xf32, #tpu.memory_space<vmem>>, vector<1x256xf32>
    %c0_77 = arith.constant 0 : index
    %c1_78 = arith.constant 1 : index
    %100 = memref.load %arg1[%c0_77, %c1_78] : memref<4x4xf32, #tpu.memory_space<smem>>
    %101 = vector.broadcast %100 : f32 to vector<1x256xf32>
    %102 = arith.mulf %101, %99 : vector<1x256xf32>
    %103 = arith.addf %98, %102 : vector<1x256xf32>
    %c6 = arith.constant 6 : index
    %c0_79 = arith.constant 0 : index
    %104 = vector.load %arg3[%c6, %c0_79] : memref<8x256xf32, #tpu.memory_space<vmem>>, vector<1x256xf32>
    %c0_80 = arith.constant 0 : index
    %c2_81 = arith.constant 2 : index
    %105 = memref.load %arg1[%c0_80, %c2_81] : memref<4x4xf32, #tpu.memory_space<smem>>
    %106 = vector.broadcast %105 : f32 to vector<1x256xf32>
    %107 = arith.mulf %106, %104 : vector<1x256xf32>
    %108 = arith.addf %103, %107 : vector<1x256xf32>
    %c7 = arith.constant 7 : index
    %c0_82 = arith.constant 0 : index
    %109 = vector.load %arg3[%c7, %c0_82] : memref<8x256xf32, #tpu.memory_space<vmem>>, vector<1x256xf32>
    %c0_83 = arith.constant 0 : index
    %c3_84 = arith.constant 3 : index
    %110 = memref.load %arg1[%c0_83, %c3_84] : memref<4x4xf32, #tpu.memory_space<smem>>
    %111 = vector.broadcast %110 : f32 to vector<1x256xf32>
    %112 = arith.mulf %111, %109 : vector<1x256xf32>
    %113 = arith.addf %108, %112 : vector<1x256xf32>
    %c4_85 = arith.constant 4 : index
    %c0_86 = arith.constant 0 : index
    %114 = vector.load %arg4[%c4_85, %c0_86] : memref<8x256xf32, #tpu.memory_space<vmem>>, vector<1x256xf32>
    tpu.vector_store %arg4[%c4_85, %c0_86], %113 {strides = array<i32>} : memref<8x256xf32, #tpu.memory_space<vmem>>, vector<1x256xf32>,
    %c1_87 = arith.constant 1 : index
    %115 = memref.load %arg2[%c1_87] : memref<4xf32, #tpu.memory_space<smem>>
    %116 = vector.broadcast %115 : f32 to vector<1x256xf32>
    %c4_88 = arith.constant 4 : index
    %c0_89 = arith.constant 0 : index
    %117 = vector.load %arg3[%c4_88, %c0_89] : memref<8x256xf32, #tpu.memory_space<vmem>>, vector<1x256xf32>
    %c1_90 = arith.constant 1 : index
    %c0_91 = arith.constant 0 : index
    %118 = memref.load %arg1[%c1_90, %c0_91] : memref<4x4xf32, #tpu.memory_space<smem>>
    %119 = vector.broadcast %118 : f32 to vector<1x256xf32>
    %120 = arith.mulf %119, %117 : vector<1x256xf32>
    %121 = arith.addf %116, %120 : vector<1x256xf32>
    %c5_92 = arith.constant 5 : index
    %c0_93 = arith.constant 0 : index
    %122 = vector.load %arg3[%c5_92, %c0_93] : memref<8x256xf32, #tpu.memory_space<vmem>>, vector<1x256xf32>
    %c1_94 = arith.constant 1 : index
    %c1_95 = arith.constant 1 : index
    %123 = memref.load %arg1[%c1_94, %c1_95] : memref<4x4xf32, #tpu.memory_space<smem>>
    %124 = vector.broadcast %123 : f32 to vector<1x256xf32>
    %125 = arith.mulf %124, %122 : vector<1x256xf32>
    %126 = arith.addf %121, %125 : vector<1x256xf32>
    %c6_96 = arith.constant 6 : index
    %c0_97 = arith.constant 0 : index
    %127 = vector.load %arg3[%c6_96, %c0_97] : memref<8x256xf32, #tpu.memory_space<vmem>>, vector<1x256xf32>
    %c1_98 = arith.constant 1 : index
    %c2_99 = arith.constant 2 : index
    %128 = memref.load %arg1[%c1_98, %c2_99] : memref<4x4xf32, #tpu.memory_space<smem>>
    %129 = vector.broadcast %128 : f32 to vector<1x256xf32>
    %130 = arith.mulf %129, %127 : vector<1x256xf32>
    %131 = arith.addf %126, %130 : vector<1x256xf32>
    %c7_100 = arith.constant 7 : index
    %c0_101 = arith.constant 0 : index
    %132 = vector.load %arg3[%c7_100, %c0_101] : memref<8x256xf32, #tpu.memory_space<vmem>>, vector<1x256xf32>
    %c1_102 = arith.constant 1 : index
    %c3_103 = arith.constant 3 : index
    %133 = memref.load %arg1[%c1_102, %c3_103] : memref<4x4xf32, #tpu.memory_space<smem>>
    %134 = vector.broadcast %133 : f32 to vector<1x256xf32>
    %135 = arith.mulf %134, %132 : vector<1x256xf32>
    %136 = arith.addf %131, %135 : vector<1x256xf32>
    %c5_104 = arith.constant 5 : index
    %c0_105 = arith.constant 0 : index
    %137 = vector.load %arg4[%c5_104, %c0_105] : memref<8x256xf32, #tpu.memory_space<vmem>>, vector<1x256xf32>
    tpu.vector_store %arg4[%c5_104, %c0_105], %136 {strides = array<i32>} : memref<8x256xf32, #tpu.memory_space<vmem>>, vector<1x256xf32>,
    %c2_106 = arith.constant 2 : index
    %138 = memref.load %arg2[%c2_106] : memref<4xf32, #tpu.memory_space<smem>>
    %139 = vector.broadcast %138 : f32 to vector<1x256xf32>
    %c4_107 = arith.constant 4 : index
    %c0_108 = arith.constant 0 : index
    %140 = vector.load %arg3[%c4_107, %c0_108] : memref<8x256xf32, #tpu.memory_space<vmem>>, vector<1x256xf32>
    %c2_109 = arith.constant 2 : index
    %c0_110 = arith.constant 0 : index
    %141 = memref.load %arg1[%c2_109, %c0_110] : memref<4x4xf32, #tpu.memory_space<smem>>
    %142 = vector.broadcast %141 : f32 to vector<1x256xf32>
    %143 = arith.mulf %142, %140 : vector<1x256xf32>
    %144 = arith.addf %139, %143 : vector<1x256xf32>
    %c5_111 = arith.constant 5 : index
    %c0_112 = arith.constant 0 : index
    %145 = vector.load %arg3[%c5_111, %c0_112] : memref<8x256xf32, #tpu.memory_space<vmem>>, vector<1x256xf32>
    %c2_113 = arith.constant 2 : index
    %c1_114 = arith.constant 1 : index
    %146 = memref.load %arg1[%c2_113, %c1_114] : memref<4x4xf32, #tpu.memory_space<smem>>
    %147 = vector.broadcast %146 : f32 to vector<1x256xf32>
    %148 = arith.mulf %147, %145 : vector<1x256xf32>
    %149 = arith.addf %144, %148 : vector<1x256xf32>
    %c6_115 = arith.constant 6 : index
    %c0_116 = arith.constant 0 : index
    %150 = vector.load %arg3[%c6_115, %c0_116] : memref<8x256xf32, #tpu.memory_space<vmem>>, vector<1x256xf32>
    %c2_117 = arith.constant 2 : index
    %c2_118 = arith.constant 2 : index
    %151 = memref.load %arg1[%c2_117, %c2_118] : memref<4x4xf32, #tpu.memory_space<smem>>
    %152 = vector.broadcast %151 : f32 to vector<1x256xf32>
    %153 = arith.mulf %152, %150 : vector<1x256xf32>
    %154 = arith.addf %149, %153 : vector<1x256xf32>
    %c7_119 = arith.constant 7 : index
    %c0_120 = arith.constant 0 : index
    %155 = vector.load %arg3[%c7_119, %c0_120] : memref<8x256xf32, #tpu.memory_space<vmem>>, vector<1x256xf32>
    %c2_121 = arith.constant 2 : index
    %c3_122 = arith.constant 3 : index
    %156 = memref.load %arg1[%c2_121, %c3_122] : memref<4x4xf32, #tpu.memory_space<smem>>
    %157 = vector.broadcast %156 : f32 to vector<1x256xf32>
    %158 = arith.mulf %157, %155 : vector<1x256xf32>
    %159 = arith.addf %154, %158 : vector<1x256xf32>
    %c6_123 = arith.constant 6 : index
    %c0_124 = arith.constant 0 : index
    %160 = vector.load %arg4[%c6_123, %c0_124] : memref<8x256xf32, #tpu.memory_space<vmem>>, vector<1x256xf32>
    tpu.vector_store %arg4[%c6_123, %c0_124], %159 {strides = array<i32>} : memref<8x256xf32, #tpu.memory_space<vmem>>, vector<1x256xf32>,
    %c3_125 = arith.constant 3 : index
    %161 = memref.load %arg2[%c3_125] : memref<4xf32, #tpu.memory_space<smem>>
    %162 = vector.broadcast %161 : f32 to vector<1x256xf32>
    %c4_126 = arith.constant 4 : index
    %c0_127 = arith.constant 0 : index
    %163 = vector.load %arg3[%c4_126, %c0_127] : memref<8x256xf32, #tpu.memory_space<vmem>>, vector<1x256xf32>
    %c3_128 = arith.constant 3 : index
    %c0_129 = arith.constant 0 : index
    %164 = memref.load %arg1[%c3_128, %c0_129] : memref<4x4xf32, #tpu.memory_space<smem>>
    %165 = vector.broadcast %164 : f32 to vector<1x256xf32>
    %166 = arith.mulf %165, %163 : vector<1x256xf32>
    %167 = arith.addf %162, %166 : vector<1x256xf32>
    %c5_130 = arith.constant 5 : index
    %c0_131 = arith.constant 0 : index
    %168 = vector.load %arg3[%c5_130, %c0_131] : memref<8x256xf32, #tpu.memory_space<vmem>>, vector<1x256xf32>
    %c3_132 = arith.constant 3 : index
    %c1_133 = arith.constant 1 : index
    %169 = memref.load %arg1[%c3_132, %c1_133] : memref<4x4xf32, #tpu.memory_space<smem>>
    %170 = vector.broadcast %169 : f32 to vector<1x256xf32>
    %171 = arith.mulf %170, %168 : vector<1x256xf32>
    %172 = arith.addf %167, %171 : vector<1x256xf32>
    %c6_134 = arith.constant 6 : index
    %c0_135 = arith.constant 0 : index
    %173 = vector.load %arg3[%c6_134, %c0_135] : memref<8x256xf32, #tpu.memory_space<vmem>>, vector<1x256xf32>
    %c3_136 = arith.constant 3 : index
    %c2_137 = arith.constant 2 : index
    %174 = memref.load %arg1[%c3_136, %c2_137] : memref<4x4xf32, #tpu.memory_space<smem>>
    %175 = vector.broadcast %174 : f32 to vector<1x256xf32>
    %176 = arith.mulf %175, %173 : vector<1x256xf32>
    %177 = arith.addf %172, %176 : vector<1x256xf32>
    %c7_138 = arith.constant 7 : index
    %c0_139 = arith.constant 0 : index
    %178 = vector.load %arg3[%c7_138, %c0_139] : memref<8x256xf32, #tpu.memory_space<vmem>>, vector<1x256xf32>
    %c3_140 = arith.constant 3 : index
    %c3_141 = arith.constant 3 : index
    %179 = memref.load %arg1[%c3_140, %c3_141] : memref<4x4xf32, #tpu.memory_space<smem>>
    %180 = vector.broadcast %179 : f32 to vector<1x256xf32>
    %181 = arith.mulf %180, %178 : vector<1x256xf32>
    %182 = arith.addf %177, %181 : vector<1x256xf32>
    %c7_142 = arith.constant 7 : index
    %c0_143 = arith.constant 0 : index
    %183 = vector.load %arg4[%c7_142, %c0_143] : memref<8x256xf32, #tpu.memory_space<vmem>>, vector<1x256xf32>
    tpu.vector_store %arg4[%c7_142, %c0_143], %182 {strides = array<i32>} : memref<8x256xf32, #tpu.memory_space<vmem>>, vector<1x256xf32>,
    return
  }
  func.func @transform_0(%arg0: i32) -> (i32, i32) {
    %c0_i32 = arith.constant 0 : i32
    %c0_i32_0 = arith.constant 0 : i32
    %c0_i32_1 = arith.constant 0 : i32
    return %c0_i32, %c0_i32_0 : i32, i32
  }
  func.func @transform_1(%arg0: i32) -> i32 {
    %c0_i32 = arith.constant 0 : i32
    %c0_i32_0 = arith.constant 0 : i32
    return %c0_i32 : i32
  }
  func.func @transform_2(%arg0: i32) -> (i32, i32) {
    %c0_i32 = arith.constant 0 : i32
    %c0_i32_0 = arith.constant 0 : i32
    return %c0_i32, %arg0 : i32, i32
  }
  func.func @transform_3(%arg0: i32) -> (i32, i32) {
    %c0_i32 = arith.constant 0 : i32
    %c0_i32_0 = arith.constant 0 : i32
    return %c0_i32, %arg0 : i32, i32
  }
}

</mosaic_0001>

<llo_original>
// kernel: tpu_custom_call.1
$region0: #{tpu_custom_call.1}
  #allocation0 [shape = 'u32[]', space=smem, size = 0x4, offset = 0x4, fixed_abs, tag = 'smem constant byte address 0x4 - core index']
  #allocation1 [shape = 'u32[144,128]{1,0:T(1,128)}', space=vmem, size = 0x12000, scoped, tag = 'internal scratch']
  %s0 = inlined_call_operand.hbm [shape: f32[4,4], index: 0, kind: input, shape index: {}]
  %s1 = inlined_call_operand.vmem [shape: f32[4], index: 1, kind: input, shape index: {}]
  %s2 = inlined_call_operand.hbm [shape: f32[8,256], index: 2, kind: input, shape index: {}]
  %s3 = inlined_call_operand.hbm [shape: f32[8,256], index: 3, kind: output, shape index: {}]
  %s4 = sld [smem:[#allocation0]]
  $region34: #{tpu_custom_call.1} parent=0
    _
  %s6 = ssub.s32 1, %s4
  %s7 = scalar_select 0, %s6, %s4
  $region1: #{tpu_custom_call.1} parent=0
    #allocation2 [shape = 'u8[2048]{0}', space=smem, size = 0x800, scoped, tag = 'input window, operand 0, single buffered']
    #allocation3 [shape = 's32[1]{0}', space=sflag, size = 0x4, scoped, tag = 'scoped memory for tpu_custom_call.1']
    #allocation4 [shape = 's32[1]{0}', space=sflag, size = 0x4, scoped, tag = 'scoped memory for tpu_custom_call.1']
    #allocation5 [shape = 's32[1]{0}', space=sflag, size = 0x4, scoped, tag = 'scoped memory for tpu_custom_call.1']
    #allocation6 [shape = 's32[1]{0}', space=sflag, size = 0x4, scoped, tag = 'scoped memory for tpu_custom_call.1']
    #allocation7 [shape = 'u8[512]{0}', space=smem, size = 0x200, scoped, tag = 'input window, operand 1, single buffered']
    #allocation8 [shape = 'u8[8192]{0}', space=vmem, size = 0x2000, scoped, tag = 'input window, operand 2, single buffered']
    #allocation9 [shape = 'u8[8192]{0}', space=vmem, size = 0x2000, scoped, tag = 'output window, operand 0, single buffered']
    %8 = vsyncpa [#allocation5], 0
    %9 = vsyncpa [#allocation6], 0
    %10 = vsyncpa [#allocation3], 0
    %11 = vsyncpa [#allocation4], 0
    // Predicated region
    $region2: #{tpu_custom_call.1} parent=1 // pred_check
      _
    $region3: #{tpu_custom_call.1} parent=1 // pred_check_branch
      %13 = sbr.rel (0) target = $region5
    $region4: #{tpu_custom_call.1} parent=1 // pred_region
      %s15 = ssub.s32 64, 64
      %16 = vsyncadd [#allocation5], %s15
      %19 = dma.hbm_to_smem %s0, 64, [#allocation2], [#allocation5]
    $region5: #{tpu_custom_call.1} parent=1 // pred_fallthru
      _
    // Predicated region
    $region6: #{tpu_custom_call.1} parent=1 // pred_check
      _
    $region7: #{tpu_custom_call.1} parent=1 // pred_check_branch
      %21 = sbr.rel (0) target = $region9
    $region8: #{tpu_custom_call.1} parent=1 // pred_region
      %s23 = ssub.s32 16, 16
      %24 = vsyncadd [#allocation6], %s23
      %s26 = sshll.u32 %s1, 4
      %s27 = int_to_ptr.vmem [resolvable:$true] %s26
      %29 = dma.vmem_to_smem %s27, 16, [#allocation7], [#allocation6]
    $region9: #{tpu_custom_call.1} parent=1 // pred_fallthru
      _
    // Predicated region
    $region10: #{tpu_custom_call.1} parent=1 // pred_check
      _
    $region11: #{tpu_custom_call.1} parent=1 // pred_check_branch
      %31 = sbr.rel (0) target = $region13
    $region12: #{tpu_custom_call.1} parent=1 // pred_region
      %s33 = ssub.s32 256, 256
      %34 = vsyncadd [#allocation3], %s33
      %s36 = sshll.u32 [#allocation8], 4
      %s37 = int_to_ptr.vmem [resolvable:$true] %s36
      %39 = dma.hbm_to_vmem [thread:$0]  %s2, 256, %s37, [#allocation3]
    $region13: #{tpu_custom_call.1} parent=1 // pred_fallthru
      _
    // Predicated region
    $region14: #{tpu_custom_call.1} parent=1 // pred_check
      _
    $region15: #{tpu_custom_call.1} parent=1 // pred_check_branch
      %41 = sbr.rel (0) target = $region17
    $region16: #{tpu_custom_call.1} parent=1 // pred_region
      %42 = dma.done [#allocation5], 64
    $region17: #{tpu_custom_call.1} parent=1 // pred_fallthru
      _
    // Predicated region
    $region18: #{tpu_custom_call.1} parent=1 // pred_check
      _
    $region19: #{tpu_custom_call.1} parent=1 // pred_check_branch
      %44 = sbr.rel (0) target = $region21
    $region20: #{tpu_custom_call.1} parent=1 // pred_region
      %45 = dma.done [#allocation6], 16
    $region21: #{tpu_custom_call.1} parent=1 // pred_fallthru
      _
    // Predicated region
    $region22: #{tpu_custom_call.1} parent=1 // pred_check
      _
    $region23: #{tpu_custom_call.1} parent=1 // pred_check_branch
      %47 = sbr.rel (0) target = $region25
    $region24: #{tpu_custom_call.1} parent=1 // pred_region
      %48 = dma.done [#allocation3], 256
    $region25: #{tpu_custom_call.1} parent=1 // pred_fallthru
      _
    %49 = sfence
    %s50 = sld [smem:[#allocation7]]
    %v51 = vstv %s50
    %v52 = vld [vmem:[#allocation8] ss:$8 sm:$0x3]
    %s53 = sld [smem:[#allocation2]]
    %v54 = vstv %s53
    %v55 = vmul.f32 %v54, %v52
    %v56 = vadd.f32 %v51, %v55
    %s57 = scalar_lea.vmem [#allocation8], 1
    %v58 = vld [vmem:[%s57] ss:$8 sm:$0x3]
    %s59 = sld [smem:[#allocation2 + $0x1]]
    %v60 = vstv %s59
    %v61 = vmul.f32 %v60, %v58
    %v62 = vadd.f32 %v56, %v61
    %s63 = scalar_lea.vmem [#allocation8], 2
    %v64 = vld [vmem:[%s63] ss:$8 sm:$0x3]
    %s65 = sld [smem:[#allocation2 + $0x2]]
    %v66 = vstv %s65
    %v67 = vmul.f32 %v66, %v64
    %v68 = vadd.f32 %v62, %v67
    %s69 = scalar_lea.vmem [#allocation8], 3
    %v70 = vld [vmem:[%s69] ss:$8 sm:$0x3]
    %s71 = sld [smem:[#allocation2 + $0x3]]
    %v72 = vstv %s71
    %v73 = vmul.f32 %v72, %v70
    %v74 = vadd.f32 %v68, %v73
    %v75 = vlaneseq
    %vm76 = vcmp.ge.s32.totalorder %v75, 0
    %vm77 = vcmp.lt.s32.totalorder %v75, 256
    %vm78 = vmand %vm76, %vm77
    %79 = vst.msk [vmem:[#allocation9] ss:$8 sm:$0x3] %vm78, %v74
    %80 = vst.msk [vmem:[#allocation9] ss:$8 sm:$0x0] %vm78, %v74
    %s81 = sld [smem:[#allocation7 + $0x1]]
    %v82 = vstv %s81
    %v83 = vld [vmem:[#allocation8] ss:$8 sm:$0x3]
    %s84 = sld [smem:[#allocation2 + $0x80]]
    %v85 = vstv %s84
    %v86 = vmul.f32 %v85, %v83
    %v87 = vadd.f32 %v82, %v86
    %v88 = vld [vmem:[%s57] ss:$8 sm:$0x3]
    %s89 = sld [smem:[#allocation2 + $0x81]]
    %v90 = vstv %s89
    %v91 = vmul.f32 %v90, %v88
    %v92 = vadd.f32 %v87, %v91
    %v93 = vld [vmem:[%s63] ss:$8 sm:$0x3]
    %s94 = sld [smem:[#allocation2 + $0x82]]
    %v95 = vstv %s94
    %v96 = vmul.f32 %v95, %v93
    %v97 = vadd.f32 %v92, %v96
    %v98 = vld [vmem:[%s69] ss:$8 sm:$0x3]
    %s99 = sld [smem:[#allocation2 + $0x83]]
    %v100 = vstv %s99
    %v101 = vmul.f32 %v100, %v98
    %v102 = vadd.f32 %v97, %v101
    %s103 = scalar_lea.vmem [#allocation9], 1
    %104 = vst.msk [vmem:[%s103] ss:$8 sm:$0x3] %vm78, %v102
    %105 = vst.msk [vmem:[%s103] ss:$8 sm:$0x0] %vm78, %v102
    %s106 = sld [smem:[#allocation7 + $0x2]]
    %v107 = vstv %s106
    %v108 = vld [vmem:[#allocation8] ss:$8 sm:$0x3]
    %s109 = sld [smem:[#allocation2 + $0x100]]
    %v110 = vstv %s109
    %v111 = vmul.f32 %v110, %v108
    %v112 = vadd.f32 %v107, %v111
    %v113 = vld [vmem:[%s57] ss:$8 sm:$0x3]
    %s114 = sld [smem:[#allocation2 + $0x101]]
    %v115 = vstv %s114
    %v116 = vmul.f32 %v115, %v113
    %v117 = vadd.f32 %v112, %v116
    %v118 = vld [vmem:[%s63] ss:$8 sm:$0x3]
    %s119 = sld [smem:[#allocation2 + $0x102]]
    %v120 = vstv %s119
    %v121 = vmul.f32 %v120, %v118
    %v122 = vadd.f32 %v117, %v121
    %v123 = vld [vmem:[%s69] ss:$8 sm:$0x3]
    %s124 = sld [smem:[#allocation2 + $0x103]]
    %v125 = vstv %s124
    %v126 = vmul.f32 %v125, %v123
    %v127 = vadd.f32 %v122, %v126
    %s128 = scalar_lea.vmem [#allocation9], 2
    %129 = vst.msk [vmem:[%s128] ss:$8 sm:$0x3] %vm78, %v127
    %130 = vst.msk [vmem:[%s128] ss:$8 sm:$0x0] %vm78, %v127
    %s131 = sld [smem:[#allocation7 + $0x3]]
    %v132 = vstv %s131
    %v133 = vld [vmem:[#allocation8] ss:$8 sm:$0x3]
    %s134 = sld [smem:[#allocation2 + $0x180]]
    %v135 = vstv %s134
    %v136 = vmul.f32 %v135, %v133
    %v137 = vadd.f32 %v132, %v136
    %v138 = vld [vmem:[%s57] ss:$8 sm:$0x3]
    %s139 = sld [smem:[#allocation2 + $0x181]]
    %v140 = vstv %s139
    %v141 = vmul.f32 %v140, %v138
    %v142 = vadd.f32 %v137, %v141
    %v143 = vld [vmem:[%s63] ss:$8 sm:$0x3]
    %s144 = sld [smem:[#allocation2 + $0x182]]
    %v145 = vstv %s144
    %v146 = vmul.f32 %v145, %v143
    %v147 = vadd.f32 %v142, %v146
    %v148 = vld [vmem:[%s69] ss:$8 sm:$0x3]
    %s149 = sld [smem:[#allocation2 + $0x183]]
    %v150 = vstv %s149
    %v151 = vmul.f32 %v150, %v148
    %v152 = vadd.f32 %v147, %v151
    %s153 = scalar_lea.vmem [#allocation9], 3
    %154 = vst.msk [vmem:[%s153] ss:$8 sm:$0x3] %vm78, %v152
    %155 = vst.msk [vmem:[%s153] ss:$8 sm:$0x0] %vm78, %v152
    %s156 = sld [smem:[#allocation7]]
    %v157 = vstv %s156
    %s158 = scalar_lea.vmem [#allocation8], 4
    %v159 = vld [vmem:[%s158] ss:$8 sm:$0x3]
    %s160 = sld [smem:[#allocation2]]
    %v161 = vstv %s160
    %v162 = vmul.f32 %v161, %v159
    %v163 = vadd.f32 %v157, %v162
    %s164 = scalar_lea.vmem [#allocation8], 5
    %v165 = vld [vmem:[%s164] ss:$8 sm:$0x3]
    %s166 = sld [smem:[#allocation2 + $0x1]]
    %v167 = vstv %s166
    %v168 = vmul.f32 %v167, %v165
    %v169 = vadd.f32 %v163, %v168
    %s170 = scalar_lea.vmem [#allocation8], 6
    %v171 = vld [vmem:[%s170] ss:$8 sm:$0x3]
    %s172 = sld [smem:[#allocation2 + $0x2]]
    %v173 = vstv %s172
    %v174 = vmul.f32 %v173, %v171
    %v175 = vadd.f32 %v169, %v174
    %s176 = scalar_lea.vmem [#allocation8], 7
    %v177 = vld [vmem:[%s176] ss:$8 sm:$0x3]
    %s178 = sld [smem:[#allocation2 + $0x3]]
    %v179 = vstv %s178
    %v180 = vmul.f32 %v179, %v177
    %v181 = vadd.f32 %v175, %v180
    %s182 = scalar_lea.vmem [#allocation9], 4
    %183 = vst.msk [vmem:[%s182] ss:$8 sm:$0x3] %vm78, %v181
    %184 = vst.msk [vmem:[%s182] ss:$8 sm:$0x0] %vm78, %v181
    %s185 = sld [smem:[#allocation7 + $0x1]]
    %v186 = vstv %s185
    %v187 = vld [vmem:[%s158] ss:$8 sm:$0x3]
    %s188 = sld [smem:[#allocation2 + $0x80]]
    %v189 = vstv %s188
    %v190 = vmul.f32 %v189, %v187
    %v191 = vadd.f32 %v186, %v190
    %v192 = vld [vmem:[%s164] ss:$8 sm:$0x3]
    %s193 = sld [smem:[#allocation2 + $0x81]]
    %v194 = vstv %s193
    %v195 = vmul.f32 %v194, %v192
    %v196 = vadd.f32 %v191, %v195
    %v197 = vld [vmem:[%s170] ss:$8 sm:$0x3]
    %s198 = sld [smem:[#allocation2 + $0x82]]
    %v199 = vstv %s198
    %v200 = vmul.f32 %v199, %v197
    %v201 = vadd.f32 %v196, %v200
    %v202 = vld [vmem:[%s176] ss:$8 sm:$0x3]
    %s203 = sld [smem:[#allocation2 + $0x83]]
    %v204 = vstv %s203
    %v205 = vmul.f32 %v204, %v202
    %v206 = vadd.f32 %v201, %v205
    %s207 = scalar_lea.vmem [#allocation9], 5
    %208 = vst.msk [vmem:[%s207] ss:$8 sm:$0x3] %vm78, %v206
    %209 = vst.msk [vmem:[%s207] ss:$8 sm:$0x0] %vm78, %v206
    %s210 = sld [smem:[#allocation7 + $0x2]]
    %v211 = vstv %s210
    %v212 = vld [vmem:[%s158] ss:$8 sm:$0x3]
    %s213 = sld [smem:[#allocation2 + $0x100]]
    %v214 = vstv %s213
    %v215 = vmul.f32 %v214, %v212
    %v216 = vadd.f32 %v211, %v215
    %v217 = vld [vmem:[%s164] ss:$8 sm:$0x3]
    %s218 = sld [smem:[#allocation2 + $0x101]]
    %v219 = vstv %s218
    %v220 = vmul.f32 %v219, %v217
    %v221 = vadd.f32 %v216, %v220
    %v222 = vld [vmem:[%s170] ss:$8 sm:$0x3]
    %s223 = sld [smem:[#allocation2 + $0x102]]
    %v224 = vstv %s223
    %v225 = vmul.f32 %v224, %v222
    %v226 = vadd.f32 %v221, %v225
    %v227 = vld [vmem:[%s176] ss:$8 sm:$0x3]
    %s228 = sld [smem:[#allocation2 + $0x103]]
    %v229 = vstv %s228
    %v230 = vmul.f32 %v229, %v227
    %v231 = vadd.f32 %v226, %v230
    %s232 = scalar_lea.vmem [#allocation9], 6
    %233 = vst.msk [vmem:[%s232] ss:$8 sm:$0x3] %vm78, %v231
    %234 = vst.msk [vmem:[%s232] ss:$8 sm:$0x0] %vm78, %v231
    %s235 = sld [smem:[#allocation7 + $0x3]]
    %v236 = vstv %s235
    %v237 = vld [vmem:[%s158] ss:$8 sm:$0x3]
    %s238 = sld [smem:[#allocation2 + $0x180]]
    %v239 = vstv %s238
    %v240 = vmul.f32 %v239, %v237
    %v241 = vadd.f32 %v236, %v240
    %v242 = vld [vmem:[%s164] ss:$8 sm:$0x3]
    %s243 = sld [smem:[#allocation2 + $0x181]]
    %v244 = vstv %s243
    %v245 = vmul.f32 %v244, %v242
    %v246 = vadd.f32 %v241, %v245
    %v247 = vld [vmem:[%s170] ss:$8 sm:$0x3]
    %s248 = sld [smem:[#allocation2 + $0x182]]
    %v249 = vstv %s248
    %v250 = vmul.f32 %v249, %v247
    %v251 = vadd.f32 %v246, %v250
    %v252 = vld [vmem:[%s176] ss:$8 sm:$0x3]
    %s253 = sld [smem:[#allocation2 + $0x183]]
    %v254 = vstv %s253
    %v255 = vmul.f32 %v254, %v252
    %v256 = vadd.f32 %v251, %v255
    %s257 = scalar_lea.vmem [#allocation9], 7
    %258 = vst.msk [vmem:[%s257] ss:$8 sm:$0x3] %vm78, %v256
    %259 = vst.msk [vmem:[%s257] ss:$8 sm:$0x0] %vm78, %v256
    // Predicated region
    $region26: #{tpu_custom_call.1} parent=1 // pred_check
      _
    $region27: #{tpu_custom_call.1} parent=1 // pred_check_branch
      %261 = sbr.rel (0) target = $region29
    $region28: #{tpu_custom_call.1} parent=1 // pred_region
      %s263 = ssub.s32 256, 256
      %264 = vsyncadd [#allocation4], %s263
      %s266 = sshll.u32 [#allocation9], 4
      %s267 = int_to_ptr.vmem [resolvable:$true] %s266
      %269 = dma.vmem_to_hbm [thread:$0]  %s267, 256, %s3, [#allocation4]
    $region29: #{tpu_custom_call.1} parent=1 // pred_fallthru
      _
    // Predicated region
    $region30: #{tpu_custom_call.1} parent=1 // pred_check
      _
    $region31: #{tpu_custom_call.1} parent=1 // pred_check_branch
      %271 = sbr.rel (0) target = $region33
    $region32: #{tpu_custom_call.1} parent=1 // pred_region
      %272 = dma.done [#allocation4], 256
    $region33: #{tpu_custom_call.1} parent=1 // pred_fallthru
      _
    %273 = vsyncpa [#allocation3], 1
    %274 = vsyncpa [#allocation4], 1
    %275 = vsyncpa [#allocation5], 1
    %276 = vsyncpa [#allocation6], 1

</llo_original>
